<compile_context>
chip_gen: v5e
topology: v5e:2x2
jax: 0.10.0
libtpu: 0.0.40
codegen_flags: <defaults>
</compile_context>

<pallas_src>
import functools

import numpy as np
import jax
import jax.numpy as jnp
from jax import lax
from jax.experimental import pallas as pl
from jax.experimental.pallas import tpu as pltpu


def _round_up(x, m):
    return (x + m - 1) // m * m


def _vmem_capacity_bytes():
    """Best-effort physical VMEM size per TensorCore; conservative fallback."""
    try:
        info = pltpu.get_tpu_info()
        cap = getattr(info, "vmem_capacity_bytes", None)
        if cap:
            return max(int(cap), 64 << 20)
    except Exception:
        pass
    return 64 << 20          # v7x-sized fallback: safe on every generation


# ----------------------------- kernel body -----------------------------------


def _focal_chunk(x_ref, t_ref, r0, rows, *, num_classes, gamma, alpha_vals,
                 needs_weight, approx_pt):
    """Per-element focal loss for `rows` sublanes starting at r0 -> (rows, L).

    All accumulators are (rows, L) = a few vregs each (rows <= 8), so the
    whole C-reduction stays register resident; logits are loaded per channel
    straight from the VMEM block (vld has 3 slots; vst is the scarce one).
    """
    C = num_classes
    sl = pl.ds(r0, rows)
    t = t_ref[0, sl, :]                        # (rows, L) int32

    # channel max (numerical stability)
    m = x_ref[0, 0, sl, :].astype(jnp.float32)
    for c in range(1, C):
        m = jnp.maximum(m, x_ref[0, c, sl, :].astype(jnp.float32))

    sum_exp = None                             # sum_c exp(x_c - m)
    z_t = None                                 # (x_t - m) gathered via compare
    ez_t = None                                # exp(x_t - m) gathered (gamma!=0)
    w_t = None                                 # alpha_t (doubles as pad mask)
    for c in range(C):
        z = x_ref[0, c, sl, :].astype(jnp.float32) - m
        ez = jnp.exp(z)
        sum_exp = ez if sum_exp is None else sum_exp + ez
        sel = t == c
        zc = jnp.where(sel, z, 0.0)
        z_t = zc if z_t is None else z_t + zc
        if gamma != 0:
            ec = jnp.where(sel, ez, 0.0)
            ez_t = ec if ez_t is None else ez_t + ec
        if needs_weight:
            a_c = 1.0 if alpha_vals is None else float(alpha_vals[c])
            wc = jnp.where(sel, jnp.float32(a_c), jnp.float32(0.0))
            w_t = wc if w_t is None else w_t + wc

    lse = jnp.log(sum_exp)
    logpt = z_t - lse                          # == log_softmax(x)[target]
    if needs_weight:
        # alpha_t for valid elements; exactly 0 for padded elements (target id
        # == C matches no channel), which also kills the -lse term.
        logpt = logpt * w_t

    if gamma == 0:
        return -logpt

    # pt = softmax(x)[target]; reuse exp(z) from the LSE pass, put the divide
    # on the (otherwise idle) EUP as an approx reciprocal when allowed.
    if approx_pt:
        pt = ez_t * pl.reciprocal(sum_exp, approx=True)
    else:
        pt = ez_t / sum_exp
    base = jnp.maximum(1.0 - pt, 0.0)          # clamp: fp rounding can give pt>1
    g = float(gamma)
    if g.is_integer() and g > 0:
        w = base                               # integer gamma: repeated multiply
        for _ in range(int(g) - 1):
            w = w * base
    else:
        # base**g lowers to exp(g*log(base)); guard base==0 against NaN
        w = jnp.where(base > 0, jnp.maximum(base, 1e-30) ** g, 0.0)
    return -w * logpt


def _focal_elems_kernel(x_ref, t_ref, o_ref, *, chunk, n_chunks, unroll, **kw):
    if n_chunks == 1:
        o_ref[0, pl.ds(0, chunk), :] = _focal_chunk(x_ref, t_ref, 0, chunk, **kw)
        return

    def body(i, carry):
        r0 = pl.multiple_of(i * chunk, chunk)
        o_ref[0, pl.ds(r0, chunk), :] = _focal_chunk(x_ref, t_ref, r0, chunk, **kw)
        return carry

    lax.fori_loop(0, n_chunks, body, 0, unroll=unroll)


def _focal_partial_kernel(x_ref, t_ref, o_ref, *, chunk, n_chunks, unroll, **kw):
    if n_chunks == 1:
        focal = _focal_chunk(x_ref, t_ref, 0, chunk, **kw)
        o_ref[...] = jnp.sum(focal, axis=0, keepdims=True)
        return

    def body(i, acc):
        r0 = pl.multiple_of(i * chunk, chunk)
        return acc + _focal_chunk(x_ref, t_ref, r0, chunk, **kw)

    acc = lax.fori_loop(0, n_chunks, body,
                        jnp.zeros((chunk, o_ref.shape[-1]), jnp.float32),
                        unroll=unroll)
    # one small sublane (XLU) reduce per tile; partials stay lane-dense
    o_ref[...] = jnp.sum(acc, axis=0, keepdims=True)


# ----------------------------- wrapper ---------------------------------------


def focal_loss(x, target, *, gamma=0.0, alpha=None, avg=True,
               lane_tile=512, row_tile=512, approx_pt=True):
    """Pallas implementation of FocalLoss.forward.

    x:      (N, C, H, W) NCHW logits (or (M, C) row logits), f32 or bf16
    target: integer class ids with N*H*W (or M) elements
    """
    # ---- channel-major view (free reshapes; identical flatten order n*S + s
    #      to the PyTorch view/transpose/view) -------------------------------
    if x.ndim > 2:
        n, c = x.shape[0], x.shape[1]
        x3 = x.reshape(n, c, -1)
        s = x3.shape[2]
    else:
        # TODO(synk): channel-minor tiling for 2-D inputs (this transpose is a
        # real XLA op, not a free reshape).
        m_rows, c = x.shape
        x3 = x.T.reshape(1, c, m_rows)
        n, s = 1, m_rows
    t2 = target.reshape(n, s).astype(jnp.int32)
    total = n * s

    # ---- static alpha baked into the kernel --------------------------------
    if alpha is None:
        alpha_vals = None
    else:
        if isinstance(alpha, (float, int)):
            a = [float(alpha), 1.0 - float(alpha)]
        else:
            a = [float(v) for v in np.asarray(alpha).ravel()]
        # NOTE: classes beyond len(alpha) get weight 0 (torch would raise here)
        alpha_vals = tuple((a + [0.0] * c)[:c])

    x_isz = jnp.dtype(x3.dtype).itemsize        # bf16 inputs accepted as-is
    out_bufs = 0 if avg else 2                  # double-buffered (tr, L) output

    # ---- spatial tiling: sublanes x lanes, sized per-generation from VMEM ---
    L = lane_tile if s >= lane_tile else _round_up(s, 128)
    r_total = _round_up(s, L) // L

    vmem_cap = _vmem_capacity_bytes()           # 64 MiB v7x, 128 MiB v5e/v6e
    block_budget = max(8 << 20, min(int(vmem_cap * 0.55), 72 << 20))
    bytes_per_row = L * (2 * c * x_isz + 2 * 4 + out_bufs * 4)
    tr_cap = max(1, block_budget // bytes_per_row)

    if r_total >= 8:
        tr = max(8, (min(row_tile, tr_cap, _round_up(r_total, 8)) // 8) * 8)
    else:
        tr = r_total
    r_pad = _round_up(r_total, tr)
    num_r_tiles = r_pad // tr

    # v7x has 2 TensorCores: give small-N inputs enough grid steps to keep
    # both cores busy and the DMA pipeline filled.
    min_steps = 4
    if r_total > 8 and n * num_r_tiles < min_steps:
        want = min(-(-min_steps // n), -(-r_total // 8))
        tr_bal = _round_up(-(-r_total // want), 8)
        if tr_bal < tr:
            tr = tr_bal
            r_pad = _round_up(r_total, tr)
            num_r_tiles = r_pad // tr

    s_pad = r_pad * L
    padded = s_pad != s
    if padded:
        x3 = jnp.pad(x3, ((0, 0), (0, 0), (0, s_pad - s)))
        # padded positions get an out-of-range class id: they contribute
        # exactly 0 loss, so no per-tile validity mask is needed
        t2 = jnp.pad(t2, ((0, 0), (0, s_pad - s)), constant_values=c)

    x4 = x3.reshape(n, c, r_pad, L)
    t3 = t2.reshape(n, r_pad, L)
    grid = (n, num_r_tiles)

    # vreg-resident chunking of the (tr, L) tile: 8 sublanes per chunk
    chunk = 8 if tr % 8 == 0 else tr
    n_chunks = tr // chunk
    unroll = True if n_chunks * c <= 256 else 4
    # TODO(synk): for very large C (hundreds), move channels onto an
    # "arbitrary" grid axis with a VMEM accumulator instead of unrolling.

    needs_weight = padded or (alpha_vals is not None)
    kern_kw = dict(num_classes=c, gamma=gamma, alpha_vals=alpha_vals,
                   needs_weight=needs_weight, approx_pt=approx_pt,
                   chunk=chunk, n_chunks=n_chunks, unroll=unroll)

    in_specs = [
        pl.BlockSpec((1, c, tr, L), lambda i, j: (i, 0, j, 0)),
        pl.BlockSpec((1, tr, L), lambda i, j: (i, j, 0)),
    ]

    est_block = bytes_per_row * tr + (2 << 20)
    vmem_limit = int(min(vmem_cap - (16 << 20),
                         max(32 << 20, est_block + (16 << 20))))
    cp = pltpu.CompilerParams(
        dimension_semantics=("parallel", "parallel"),
        vmem_limit_bytes=vmem_limit,
    )
    padded_total = n * s_pad
    cost = pl.CostEstimate(
        flops=int((6 * c + 12) * padded_total),
        transcendentals=int((c + 2) * padded_total),
        bytes_accessed=int((c * x_isz + 8) * padded_total),
    )

    if avg:
        g_total = n * num_r_tiles
        partials = pl.pallas_call(
            functools.partial(_focal_partial_kernel, **kern_kw),
            out_shape=jax.ShapeDtypeStruct((1, g_total * L), jnp.float32),
            grid_spec=pltpu.PrefetchScalarGridSpec(
                num_scalar_prefetch=0,
                grid=grid,
                in_specs=in_specs,
                out_specs=pl.BlockSpec(
                    (1, L), lambda i, j, nrt=num_r_tiles: (0, i * nrt + j)),
            ),
            compiler_params=cp,
            cost_estimate=cost,
        )(x4, t3)
        return jnp.sum(partials) / jnp.float32(total)

    out = pl.pallas_call(
        functools.partial(_focal_elems_kernel, **kern_kw),
        out_shape=jax.ShapeDtypeStruct((n, r_pad, L), jnp.float32),
        grid_spec=pltpu.PrefetchScalarGridSpec(
            num_scalar_prefetch=0,
            grid=grid,
            in_specs=in_specs,
            out_specs=pl.BlockSpec((1, tr, L), lambda i, j: (i, j, 0)),
        ),
        compiler_params=cp,
        cost_estimate=cost,
    )(x4, t3)
    return out.reshape(n, s_pad)[:, :s].reshape(-1)


def bce_loss(x, target):
    """BceLoss.forward == FocalLoss(gamma=0, alpha=None, avg=True)."""
    return focal_loss(x, target, gamma=0.0, alpha=None, avg=True)


# ----------------------------- reference --------------------------------------


def focal_loss_ref(x, target, *, gamma=0.0, alpha=None, avg=True):
    """Pure-JAX transliteration of the PyTorch forward, for checking."""
    if x.ndim > 2:
        n, c = x.shape[0], x.shape[1]
        x2 = x.reshape(n, c, -1).transpose(0, 2, 1).reshape(-1, c)
    else:
        x2 = x
    t = target.reshape(-1).astype(jnp.int32)
    logp = jax.nn.log_softmax(x2, axis=1)
    logpt = jnp.take_along_axis(logp, t[:, None], axis=1)[:, 0]
    pt = jnp.exp(logpt)
    if alpha is not None:
        if isinstance(alpha, (float, int)):
            a = jnp.array([alpha, 1.0 - alpha], dtype=jnp.float32)
        else:
            a = jnp.asarray(alpha, dtype=jnp.float32)
        logpt = logpt * a[t]
    loss = -1.0 * (1.0 - pt) ** gamma * logpt
    return loss.mean() if avg else loss


# ----------------------------- main --------------------------------------------

if __name__ == "__main__":
    key = jax.random.PRNGKey(0)
    kx, kt = jax.random.split(key)

    N, C, H, W = 2, 4, 16, 16
    x = jax.random.normal(kx, (N, C, H, W), dtype=jnp.float32)
    target = jax.random.randint(kt, (N, H, W), 0, C, dtype=jnp.int32)

    # BceLoss config (gamma=0, alpha=None, avg=True): exact path, strict check
    out0 = bce_loss(x, target)
    jax.block_until_ready(out0)
    ref0 = focal_loss_ref(x, target, gamma=0.0, alpha=None, avg=True)
    assert jnp.allclose(out0, ref0, rtol=1e-5, atol=1e-5), (out0, ref0)

    # focal config (gamma=2, per-class alpha) with precise pt: strict check
    alpha = [0.1, 0.2, 0.3, 0.4]
    out1 = focal_loss(x, target, gamma=2.0, alpha=alpha, avg=True,
                      approx_pt=False)
    jax.block_until_ready(out1)
    ref1 = focal_loss_ref(x, target, gamma=2.0, alpha=alpha, avg=True)
    assert jnp.allclose(out1, ref1, rtol=1e-5, atol=1e-5), (out1, ref1)

    # default fast path (approx EUP reciprocal for pt), avg=False per-element
    # losses; tolerance loosened to cover the approximate reciprocal.
    out2 = focal_loss(x, target, gamma=2.0, alpha=alpha, avg=False)
    jax.block_until_ready(out2)
    ref2 = focal_loss_ref(x, target, gamma=2.0, alpha=alpha, avg=False)
    assert out2.shape == (N * H * W,)
    assert jnp.allclose(out2, ref2, rtol=5e-3, atol=5e-3)

    print("KERNEL_OK")
</pallas_src>

<mosaic_0001>
module attributes {stable_mosaic.version = 11 : i64} {
  func.func @_focal_partial_kernel(%arg0: i32, %arg1: i32, %arg2: memref<1x4x1x256xf32, #tpu.memory_space<vmem>>, %arg3: memref<1x1x256xi32, #tpu.memory_space<vmem>>, %arg4: memref<1x256xf32, #tpu.memory_space<vmem>>) attributes {dimension_semantics = [#tpu.dimension_semantics<parallel>, #tpu.dimension_semantics<parallel>], iteration_bounds = array<i64: 2, 1>, scalar_prefetch = 0 : i64, scratch_operands = 0 : i64, tpu.core_type = #tpu.core_type<tc>, window_params = [{transform_indices = @transform_0, window_bounds = array<i64: 1, 4, 1, 256>}, {transform_indices = @transform_1, window_bounds = array<i64: 1, 1, 256>}, {transform_indices = @transform_2, window_bounds = array<i64: 1, 256>}]} {
    %c0 = arith.constant 0 : index
    %c0_0 = arith.constant 0 : index
    %c0_1 = arith.constant 0 : index
    %0 = vector.load %arg3[%c0, %c0_0, %c0_1] : memref<1x1x256xi32, #tpu.memory_space<vmem>>, vector<1x1x256xi32>
    %1 = vector.shape_cast %0 : vector<1x1x256xi32> to vector<1x256xi32>
    %c0_2 = arith.constant 0 : index
    %c0_3 = arith.constant 0 : index
    %c0_4 = arith.constant 0 : index
    %c0_5 = arith.constant 0 : index
    %2 = vector.load %arg2[%c0_2, %c0_3, %c0_4, %c0_5] : memref<1x4x1x256xf32, #tpu.memory_space<vmem>>, vector<1x1x1x256xf32>
    %3 = vector.shape_cast %2 : vector<1x1x1x256xf32> to vector<1x256xf32>
    %c0_6 = arith.constant 0 : index
    %c1 = arith.constant 1 : index
    %c0_7 = arith.constant 0 : index
    %c0_8 = arith.constant 0 : index
    %4 = vector.load %arg2[%c0_6, %c1, %c0_7, %c0_8] : memref<1x4x1x256xf32, #tpu.memory_space<vmem>>, vector<1x1x1x256xf32>
    %5 = vector.shape_cast %4 : vector<1x1x1x256xf32> to vector<1x256xf32>
    %6 = arith.maximumf %3, %5 : vector<1x256xf32>
    %c0_9 = arith.constant 0 : index
    %c2 = arith.constant 2 : index
    %c0_10 = arith.constant 0 : index
    %c0_11 = arith.constant 0 : index
    %7 = vector.load %arg2[%c0_9, %c2, %c0_10, %c0_11] : memref<1x4x1x256xf32, #tpu.memory_space<vmem>>, vector<1x1x1x256xf32>
    %8 = vector.shape_cast %7 : vector<1x1x1x256xf32> to vector<1x256xf32>
    %9 = arith.maximumf %6, %8 : vector<1x256xf32>
    %c0_12 = arith.constant 0 : index
    %c3 = arith.constant 3 : index
    %c0_13 = arith.constant 0 : index
    %c0_14 = arith.constant 0 : index
    %10 = vector.load %arg2[%c0_12, %c3, %c0_13, %c0_14] : memref<1x4x1x256xf32, #tpu.memory_space<vmem>>, vector<1x1x1x256xf32>
    %11 = vector.shape_cast %10 : vector<1x1x1x256xf32> to vector<1x256xf32>
    %12 = arith.maximumf %9, %11 : vector<1x256xf32>
    %c0_15 = arith.constant 0 : index
    %c0_16 = arith.constant 0 : index
    %c0_17 = arith.constant 0 : index
    %c0_18 = arith.constant 0 : index
    %13 = vector.load %arg2[%c0_15, %c0_16, %c0_17, %c0_18] : memref<1x4x1x256xf32, #tpu.memory_space<vmem>>, vector<1x1x1x256xf32>
    %14 = vector.shape_cast %13 : vector<1x1x1x256xf32> to vector<1x256xf32>
    %15 = arith.subf %14, %12 : vector<1x256xf32>
    %16 = math.exp %15 : vector<1x256xf32>
    %c0_i32 = arith.constant 0 : i32
    %17 = vector.broadcast %c0_i32 : i32 to vector<1x256xi32>
    %18 = arith.cmpi eq, %1, %17 : vector<1x256xi32>
    %cst = arith.constant 0.000000e+00 : f32
    %19 = vector.broadcast %cst : f32 to vector<1x256xf32>
    %20 = arith.select %18, %15, %19 : vector<1x256xi1>, vector<1x256xf32>
    %c0_19 = arith.constant 0 : index
    %c1_20 = arith.constant 1 : index
    %c0_21 = arith.constant 0 : index
    %c0_22 = arith.constant 0 : index
    %21 = vector.load %arg2[%c0_19, %c1_20, %c0_21, %c0_22] : memref<1x4x1x256xf32, #tpu.memory_space<vmem>>, vector<1x1x1x256xf32>
    %22 = vector.shape_cast %21 : vector<1x1x1x256xf32> to vector<1x256xf32>
    %23 = arith.subf %22, %12 : vector<1x256xf32>
    %24 = math.exp %23 : vector<1x256xf32>
    %25 = arith.addf %16, %24 : vector<1x256xf32>
    %c1_i32 = arith.constant 1 : i32
    %26 = vector.broadcast %c1_i32 : i32 to vector<1x256xi32>
    %27 = arith.cmpi eq, %1, %26 : vector<1x256xi32>
    %cst_23 = arith.constant 0.000000e+00 : f32
    %28 = vector.broadcast %cst_23 : f32 to vector<1x256xf32>
    %29 = arith.select %27, %23, %28 : vector<1x256xi1>, vector<1x256xf32>
    %30 = arith.addf %20, %29 : vector<1x256xf32>
    %c0_24 = arith.constant 0 : index
    %c2_25 = arith.constant 2 : index
    %c0_26 = arith.constant 0 : index
    %c0_27 = arith.constant 0 : index
    %31 = vector.load %arg2[%c0_24, %c2_25, %c0_26, %c0_27] : memref<1x4x1x256xf32, #tpu.memory_space<vmem>>, vector<1x1x1x256xf32>
    %32 = vector.shape_cast %31 : vector<1x1x1x256xf32> to vector<1x256xf32>
    %33 = arith.subf %32, %12 : vector<1x256xf32>
    %34 = math.exp %33 : vector<1x256xf32>
    %35 = arith.addf %25, %34 : vector<1x256xf32>
    %c2_i32 = arith.constant 2 : i32
    %36 = vector.broadcast %c2_i32 : i32 to vector<1x256xi32>
    %37 = arith.cmpi eq, %1, %36 : vector<1x256xi32>
    %cst_28 = arith.constant 0.000000e+00 : f32
    %38 = vector.broadcast %cst_28 : f32 to vector<1x256xf32>
    %39 = arith.select %37, %33, %38 : vector<1x256xi1>, vector<1x256xf32>
    %40 = arith.addf %30, %39 : vector<1x256xf32>
    %c0_29 = arith.constant 0 : index
    %c3_30 = arith.constant 3 : index
    %c0_31 = arith.constant 0 : index
    %c0_32 = arith.constant 0 : index
    %41 = vector.load %arg2[%c0_29, %c3_30, %c0_31, %c0_32] : memref<1x4x1x256xf32, #tpu.memory_space<vmem>>, vector<1x1x1x256xf32>
    %42 = vector.shape_cast %41 : vector<1x1x1x256xf32> to vector<1x256xf32>
    %43 = arith.subf %42, %12 : vector<1x256xf32>
    %44 = math.exp %43 : vector<1x256xf32>
    %45 = arith.addf %35, %44 : vector<1x256xf32>
    %c3_i32 = arith.constant 3 : i32
    %46 = vector.broadcast %c3_i32 : i32 to vector<1x256xi32>
    %47 = arith.cmpi eq, %1, %46 : vector<1x256xi32>
    %cst_33 = arith.constant 0.000000e+00 : f32
    %48 = vector.broadcast %cst_33 : f32 to vector<1x256xf32>
    %49 = arith.select %47, %43, %48 : vector<1x256xi1>, vector<1x256xf32>
    %50 = arith.addf %40, %49 : vector<1x256xf32>
    %51 = math.log %45 : vector<1x256xf32>
    %52 = arith.subf %50, %51 : vector<1x256xf32>
    %cst_34 = arith.constant 0.000000e+00 : f32
    %53 = vector.broadcast %cst_34 : f32 to vector<1x256xf32>
    %54 = arith.subf %53, %52 : vector<1x256xf32>
    %cst_35 = arith.constant dense<0.000000e+00> : vector<256xf32>
    %55 = vector.multi_reduction <add>, %54, %cst_35 [0] : vector<1x256xf32> to vector<256xf32>
    %56 = vector.shape_cast %55 : vector<256xf32> to vector<1x256xf32>
    %c0_36 = arith.constant 0 : index
    %c0_37 = arith.constant 0 : index
    %57 = vector.load %arg4[%c0_36, %c0_37] : memref<1x256xf32, #tpu.memory_space<vmem>>, vector<1x256xf32>
    tpu.vector_store %arg4[%c0_36, %c0_37], %56 {strides = array<i32>} : memref<1x256xf32, #tpu.memory_space<vmem>>, vector<1x256xf32>,
    return
  }
  func.func @transform_0(%arg0: i32, %arg1: i32) -> (i32, i32, i32, i32) {
    %c0_i32 = arith.constant 0 : i32
    %c0_i32_0 = arith.constant 0 : i32
    %c0_i32_1 = arith.constant 0 : i32
    return %arg0, %c0_i32, %arg1, %c0_i32_0 : i32, i32, i32, i32
  }
  func.func @transform_1(%arg0: i32, %arg1: i32) -> (i32, i32, i32) {
    %c0_i32 = arith.constant 0 : i32
    %c0_i32_0 = arith.constant 0 : i32
    return %arg0, %arg1, %c0_i32 : i32, i32, i32
  }
  func.func @transform_2(%arg0: i32, %arg1: i32) -> (i32, i32) {
    %c1_i32 = arith.constant 1 : i32
    %0 = arith.muli %arg0, %c1_i32 : i32
    %1 = arith.addi %0, %arg1 : i32
    %c0_i32 = arith.constant 0 : i32
    %c0_i32_0 = arith.constant 0 : i32
    return %c0_i32, %1 : i32, i32
  }
}

</mosaic_0001>

<llo_original>
// kernel: tpu_custom_call.1
$region0: #{tpu_custom_call.1}
  #allocation0 [shape = 'u32[]', space=smem, size = 0x4, offset = 0x4, fixed_abs, tag = 'smem constant byte address 0x4 - core index']
  #allocation1 [shape = 'u32[72,128]{1,0:T(1,128)}', space=vmem, size = 0x9000, scoped, tag = 'internal scratch']
  %s0 = inlined_call_operand.hbm [shape: f32[2,4,1,256], index: 0, kind: input, shape index: {}]
  %s1 = inlined_call_operand.hbm [shape: s32[2,1,256], index: 1, kind: input, shape index: {}]
  %s2 = inlined_call_operand.hbm [shape: f32[1,512], index: 2, kind: output, shape index: {}]
  %s3 = sld [smem:[#allocation0]]
  $region49: #{tpu_custom_call.1} parent=0
    _
  %s5 = ssub.s32 1, %s3
  %s6 = scalar_select 0, %s5, %s3
  $region1: #{tpu_custom_call.1} parent=0
    #allocation2 [shape = 'u8[8192]{0}', space=vmem, size = 0x2000, scoped, tag = 'input window, operand 0']
    #allocation3 [shape = 's32[2]{0}', space=sflag, size = 0x8, scoped, tag = 'scoped memory for tpu_custom_call.1']
    #allocation4 [shape = 's32[2]{0}', space=sflag, size = 0x8, scoped, tag = 'scoped memory for tpu_custom_call.1']
    #allocation5 [shape = 'u8[2048]{0}', space=vmem, size = 0x800, scoped, tag = 'input window, operand 1']
    #allocation6 [shape = 's32[2]{0}', space=sflag, size = 0x8, scoped, tag = 'scoped memory for tpu_custom_call.1']
    #allocation7 [shape = 'u8[2048]{0}', space=vmem, size = 0x800, scoped, tag = 'output window, operand 0']
    %7 = vsyncpa [#allocation3], 0
    %s8 = scalar_lea.sflag [#allocation3], 1
    %9 = vsyncpa %s8, 0
    %10 = vsyncpa [#allocation6], 0
    %s11 = scalar_lea.sflag [#allocation6], 1
    %12 = vsyncpa %s11, 0
    %13 = vsyncpa [#allocation4], 0
    %s14 = scalar_lea.sflag [#allocation4], 1
    %15 = vsyncpa %s14, 0
    loop: start=0, step=1, limit=4
    $region2: #{tpu_custom_call.1} parent=1 // loop_pre_header
      _
    $region3: #{tpu_custom_call.1} parent=1 // loop_header
      %s17 = sphi 0, %s21
      %p18 = scmp.ge.s32.totalorder %s17, 4
      %s24 = sphi 0, %s36
      %s25 = sphi 0, %s32
      %s26 = sphi 0, %s24
      %s27 = sphi 0, %s25
      %s28 = sphi 0, %s26
      %s29 = sphi 0, %s27
      %s41 = sphi 0, %s43
      %s44 = sphi 0, %s41
      %s45 = sphi 0, %s44
      %s61 = sphi 0, %s45
      %s69 = sphi 0, %s71
      %s72 = sphi 0, %s69
      %s73 = sphi 0, %s72
      %s89 = sphi 0, %s73
      %s97 = sphi 0, %s99
      %s100 = sphi 0, %s97
      %s101 = sphi 0, %s100
      %s117 = sphi 0, %s101
    $region4: #{tpu_custom_call.1} parent=1 // loop_header_branch
      %20 = sbr.rel (%p18) target = $region8
    $region5: #{tpu_custom_call.1} parent=1 // loop_body
      %s22 = ssub.s32 %s17, 1
      %s23 = ssub.s32 %s17, 2
      %s30 = sadd.s32 1, %s25
      %p31 = scmp.ge.s32.totalorder %s30, 1
      %s32 = scalar_select %p31, 0, %s30
      %s33 = sadd.s32 1, %s24
      %s34 = scalar_select %p31, %s33, %s24
      %p35 = scmp.ge.s32.totalorder %s34, 2
      %s36 = scalar_select %p35, 0, %s34
      %s37 = ssub.s32 %s24, %s36
      %s38 = ssub.s32 %s25, %s32
      %s39 = sor.u32 %s37, %s38
      %p40 = scmp.eq.s32.totalorder %s39, 0
      %s42 = sadd.s32 %s41, 1
      %s43 = scalar_select %p40, %s41, %s42
      %p46 = pneg %p40
      %p47 = scmp.eq.s32.totalorder %s17, 1
      %p48 = por %p46, %p47
      %p49 = scmp.ne.s32.totalorder %s41, %s44
      %p50 = scmp.eq.s32.totalorder %s17, 0
      %p51 = por %p49, %p50
      %p52 = scmp.ne.s32.totalorder %s41, %s44
      %p53 = scmp.eq.s32.totalorder %s22, 1
      %p54 = por %p52, %p53
      %p55 = scmp.ne.s32.totalorder %s44, %s45
      %p56 = scmp.eq.s32.totalorder %s22, 0
      %p57 = por %p55, %p56
      %p58 = scmp.ne.s32.totalorder %s44, %s45
      %p59 = scmp.eq.s32.totalorder %s23, 1
      %p60 = por %p58, %p59
      %p62 = scmp.ne.s32.totalorder %s45, %s61
      %p63 = scmp.eq.s32.totalorder %s23, 0
      %p64 = por %p62, %p63
      %s65 = ssub.s32 %s24, %s36
      %s66 = ssub.s32 %s25, %s32
      %s67 = sor.u32 %s65, %s66
      %p68 = scmp.eq.s32.totalorder %s67, 0
      %s70 = sadd.s32 %s69, 1
      %s71 = scalar_select %p68, %s69, %s70
      %p74 = pneg %p68
      %p75 = scmp.eq.s32.totalorder %s17, 1
      %p76 = por %p74, %p75
      %p77 = scmp.ne.s32.totalorder %s69, %s72
      %p78 = scmp.eq.s32.totalorder %s17, 0
      %p79 = por %p77, %p78
      %p80 = scmp.ne.s32.totalorder %s69, %s72
      %p81 = scmp.eq.s32.totalorder %s22, 1
      %p82 = por %p80, %p81
      %p83 = scmp.ne.s32.totalorder %s72, %s73
      %p84 = scmp.eq.s32.totalorder %s22, 0
      %p85 = por %p83, %p84
      %p86 = scmp.ne.s32.totalorder %s72, %s73
      %p87 = scmp.eq.s32.totalorder %s23, 1
      %p88 = por %p86, %p87
      %p90 = scmp.ne.s32.totalorder %s73, %s89
      %p91 = scmp.eq.s32.totalorder %s23, 0
      %p92 = por %p90, %p91
      %s93 = sadd.s32 %s24, %s25
      %s94 = sadd.s32 %s36, %s32
      %s95 = ssub.s32 %s93, %s94
      %p96 = scmp.eq.s32.totalorder %s95, 0
      %s98 = sadd.s32 %s97, 1
      %s99 = scalar_select %p96, %s97, %s98
      %p102 = pneg %p96
      %p103 = scmp.eq.s32.totalorder %s17, 1
      %p104 = por %p102, %p103
      %p105 = scmp.ne.s32.totalorder %s97, %s100
      %p106 = scmp.eq.s32.totalorder %s17, 0
      %p107 = por %p105, %p106
      %p108 = scmp.ne.s32.totalorder %s97, %s100
      %p109 = scmp.eq.s32.totalorder %s22, 1
      %p110 = por %p108, %p109
      %p111 = scmp.ne.s32.totalorder %s100, %s101
      %p112 = scmp.eq.s32.totalorder %s22, 0
      %p113 = por %p111, %p112
      %p114 = scmp.ne.s32.totalorder %s100, %s101
      %p115 = scmp.eq.s32.totalorder %s23, 1
      %p116 = por %p114, %p115
      %p118 = scmp.ne.s32.totalorder %s101, %s117
      %p119 = scmp.eq.s32.totalorder %s23, 0
      %p120 = por %p118, %p119
      %p121 = scmp.le.s32.totalorder 1, %s17
      %p122 = scmp.lt.s32.totalorder %s17, 3
      %p123 = pnand %p121, %p122
      %p124 = pneg %p123
      // Predicated region
      $region9: #{tpu_custom_call.1} parent=5 // pred_check
        _
      $region10: #{tpu_custom_call.1} parent=5 // pred_check_branch
        %126 = sbr.rel (%p123) target = $region12
      $region11: #{tpu_custom_call.1} parent=5 // pred_region
        %s127 = ssub.s32 %s17, 1
      $region12: #{tpu_custom_call.1} parent=5 // pred_fallthru
        _
      %p128 = scmp.lt.s32.totalorder %s17, 2
      // Predicated region
      $region13: #{tpu_custom_call.1} parent=5 // pred_check
        %p129 = pneg %p128
      $region14: #{tpu_custom_call.1} parent=5 // pred_check_branch
        %131 = sbr.rel (%p129) target = $region16
      $region15: #{tpu_custom_call.1} parent=5 // pred_region
        // Predicated region
        $region17: #{tpu_custom_call.1} parent=15 // pred_check
          %p132 = pneg %p51
        $region18: #{tpu_custom_call.1} parent=15 // pred_check_branch
          %134 = sbr.rel (%p132) target = $region20
        $region19: #{tpu_custom_call.1} parent=15 // pred_region
          %s135 = sand.u32 %s41, 1
          %s136 = scalar_lea.sflag [#allocation3], %s135
          %s137 = sand.u32 %s41, 1
          %s138 = smul.addr %s137, 8
          %s139 = scalar_lea.vmem [#allocation2], %s138
          %141 = vsyncadd %s136, 0
          %s142 = smul.addr %s25, 2
          %s143 = smul.addr %s24, 8
          %s144 = sadd.s32 %s142, %s143
          %s145 = scalar_lea.hbm %s0, %s144
          %s146 = sshll.u32 %s145, 4
          %s147 = int_to_ptr.hbm [resolvable:$true] %s146
          %s148 = sshll.u32 %s139, 4
          %s149 = int_to_ptr.vmem [resolvable:$true] %s148
          %154 = dma.hbm_to_vmem [thread:$0]  %s147, 128, %s149, %s136, 32, 32, 2
        $region20: #{tpu_custom_call.1} parent=15 // pred_fallthru
          _
        // Predicated region
        $region21: #{tpu_custom_call.1} parent=15 // pred_check
          %p155 = pneg %p79
        $region22: #{tpu_custom_call.1} parent=15 // pred_check_branch
          %157 = sbr.rel (%p155) target = $region24
        $region23: #{tpu_custom_call.1} parent=15 // pred_region
          %s158 = sand.u32 %s69, 1
          %s159 = scalar_lea.sflag [#allocation6], %s158
          %s160 = sand.u32 %s69, 1
          %s161 = smul.addr %s160, 2
          %s162 = scalar_lea.vmem [#allocation5], %s161
          %164 = vsyncadd %s159, 0
          %s165 = smul.addr %s25, 2
          %s166 = smul.addr %s24, 2
          %s167 = sadd.s32 %s165, %s166
          %s168 = scalar_lea.hbm %s1, %s167
          %s170 = sshll.u32 %s168, 4
          %s171 = int_to_ptr.hbm [resolvable:$true] %s170
          %s172 = sshll.u32 %s162, 4
          %s173 = int_to_ptr.vmem [resolvable:$true] %s172
          %175 = dma.hbm_to_vmem [thread:$0]  %s171, 32, %s173, %s159
        $region24: #{tpu_custom_call.1} parent=15 // pred_fallthru
          _
      $region16: #{tpu_custom_call.1} parent=5 // pred_fallthru
        _
      %p176 = scmp.le.s32.totalorder 1, %s17
      %p177 = scmp.lt.s32.totalorder %s17, 3
      %p178 = pnand %p176, %p177
      %p179 = pneg %p178
      // Predicated region
      $region25: #{tpu_custom_call.1} parent=5 // pred_check
        _
      $region26: #{tpu_custom_call.1} parent=5 // pred_check_branch
        %181 = sbr.rel (%p178) target = $region28
      $region27: #{tpu_custom_call.1} parent=5 // pred_region
        %s182 = ssub.s32 %s17, 1
        %s183 = sand.u32 %s44, 1
        %s184 = scalar_lea.sflag [#allocation3], %s183
        %s185 = sand.u32 %s44, 1
        %s186 = smul.addr %s185, 8
        %s187 = scalar_lea.vmem [#allocation2], %s186
        // Predicated region
        $region29: #{tpu_custom_call.1} parent=27 // pred_check
          %p188 = pneg %p57
        $region30: #{tpu_custom_call.1} parent=27 // pred_check_branch
          %190 = sbr.rel (%p188) target = $region32
        $region31: #{tpu_custom_call.1} parent=27 // pred_region
          %192 = dma.done %s184, 128
        $region32: #{tpu_custom_call.1} parent=27 // pred_fallthru
          _
        %s193 = sand.u32 %s72, 1
        %s194 = scalar_lea.sflag [#allocation6], %s193
        %s195 = sand.u32 %s72, 1
        %s196 = smul.addr %s195, 2
        %s197 = scalar_lea.vmem [#allocation5], %s196
        // Predicated region
        $region33: #{tpu_custom_call.1} parent=27 // pred_check
          %p198 = pneg %p85
        $region34: #{tpu_custom_call.1} parent=27 // pred_check_branch
          %200 = sbr.rel (%p198) target = $region36
        $region35: #{tpu_custom_call.1} parent=27 // pred_region
          %202 = dma.done %s194, 32
        $region36: #{tpu_custom_call.1} parent=27 // pred_fallthru
          _
        %s203 = sand.u32 %s44, 1
        %s204 = scalar_lea.sflag [#allocation3], %s203
        %s205 = sand.u32 %s44, 1
        %s206 = smul.addr %s205, 8
        %s207 = scalar_lea.vmem [#allocation2], %s206
        %p208 = pneg %p57
        %p209 = pneg %p54
        %s210 = sand.u32 %s72, 1
        %s211 = scalar_lea.sflag [#allocation6], %s210
        %s212 = sand.u32 %s72, 1
        %s213 = smul.addr %s212, 2
        %s214 = scalar_lea.vmem [#allocation5], %s213
        %p215 = pneg %p85
        %p216 = pneg %p82
        %p217 = pneg %p113
        %p218 = pneg %p110
        %s219 = sand.u32 %s100, 1
        %s220 = scalar_lea.sflag [#allocation4], %s219
        %s221 = sand.u32 %s100, 1
        %s222 = smul.addr %s221, 2
        %s223 = scalar_lea.vmem [#allocation7], %s222
        %s224 = sadd.s32 %s26, %s27
        %s225 = smul.u32 2, %s224
        %v226 = vld [vmem:[%s197] sm:$0x3]
        %v227 = vld [vmem:[%s187] sm:$0x3]
        %s228 = scalar_lea.vmem %s187, 2 [#allocation2]
        %v229 = vld [vmem:[%s228] sm:$0x3]
        %v230 = vmax.f32 %v227, %v229
        %s231 = scalar_lea.vmem %s187, 4 [#allocation2]
        %v232 = vld [vmem:[%s231] sm:$0x3]
        %v233 = vmax.f32 %v230, %v232
        %s234 = scalar_lea.vmem %s187, 6 [#allocation2]
        %v235 = vld [vmem:[%s234] sm:$0x3]
        %v236 = vmax.f32 %v233, %v235
        %v237 = vsub.f32 %v227, %v236
        %v238 = vmul.f32 %v237, 1.442695
        %v239 = vpow.pop %v238
        %vm240 = vcmp.eq.s32.totalorder %v226, 0
        %v241 = vsel %vm240, %v237, 0.0
        %v242 = vsub.f32 %v229, %v236
        %v243 = vmul.f32 %v242, 1.442695
        %v244 = vpow.pop %v243
        %v245 = vadd.f32 %v239, %v244
        %vm246 = vcmp.eq.s32.totalorder %v226, 1
        %v247 = vsel %vm246, %v242, 0.0
        %v248 = vadd.f32 %v241, %v247
        %v249 = vsub.f32 %v232, %v236
        %v250 = vmul.f32 %v249, 1.442695
        %v251 = vpow.pop %v250
        %v252 = vadd.f32 %v245, %v251
        %vm253 = vcmp.eq.s32.totalorder %v226, 2
        %v254 = vsel %vm253, %v249, 0.0
        %v255 = vadd.f32 %v248, %v254
        %v256 = vsub.f32 %v235, %v236
        %v257 = vmul.f32 %v256, 1.442695
        %v258 = vpow.pop %v257
        %v259 = vadd.f32 %v252, %v258
        %vm260 = vcmp.eq.s32.totalorder %v226, 3
        %v261 = vsel %vm260, %v256, 0.0
        %v262 = vadd.f32 %v255, %v261
        %v263 = vlog2.pop %v259
        %v264 = vmul.f32 %v263, 0.6931472
        %v265 = vsub.f32 %v262, %v264
        %v266 = vsub.f32 0.0, %v265
        %v267 = vadd.f32 %v266, 0.0
        %v268 = vlaneseq
        %vm269 = vcmp.ge.s32.totalorder %v268, 0
        %vm270 = vcmp.lt.s32.totalorder %v268, 256
        %vm271 = vmand %vm269, %vm270
        %272 = vst.msk [vmem:[%s223] sm:$0x3] %vm271, %v267
        %s273 = sand.u32 %s100, 1
        %s274 = scalar_lea.sflag [#allocation4], %s273
        %s275 = sand.u32 %s100, 1
        %s276 = smul.addr %s275, 2
        %s277 = scalar_lea.vmem [#allocation7], %s276
        // Predicated region
        $region37: #{tpu_custom_call.1} parent=27 // pred_check
          %p278 = pneg %p110
        $region38: #{tpu_custom_call.1} parent=27 // pred_check_branch
          %280 = sbr.rel (%p278) target = $region40
        $region39: #{tpu_custom_call.1} parent=27 // pred_region
          %s281 = sadd.s32 %s26, %s27
          %s282 = smul.u32 2, %s281
          %284 = vsyncadd %s274, 0
          %s285 = scalar_lea.hbm %s2, %s282
          %s287 = sshll.u32 %s277, 4
          %s288 = int_to_ptr.vmem [resolvable:$true] %s287
          %s289 = sshll.u32 %s285, 4
          %s290 = int_to_ptr.hbm [resolvable:$true] %s289
          %292 = dma.vmem_to_hbm [thread:$0]  %s288, 32, %s290, %s274
        $region40: #{tpu_custom_call.1} parent=27 // pred_fallthru
          _
      $region28: #{tpu_custom_call.1} parent=5 // pred_fallthru
        _
      %p293 = scmp.le.s32.totalorder 2, %s17
      // Predicated region
      $region41: #{tpu_custom_call.1} parent=5 // pred_check
        %p294 = pneg %p293
      $region42: #{tpu_custom_call.1} parent=5 // pred_check_branch
        %296 = sbr.rel (%p294) target = $region44
      $region43: #{tpu_custom_call.1} parent=5 // pred_region
        %s297 = ssub.s32 %s17, 2
        // Predicated region
        $region45: #{tpu_custom_call.1} parent=43 // pred_check
          %p298 = pneg %p116
        $region46: #{tpu_custom_call.1} parent=43 // pred_check_branch
          %300 = sbr.rel (%p298) target = $region48
        $region47: #{tpu_custom_call.1} parent=43 // pred_region
          %s301 = sand.u32 %s101, 1
          %s302 = scalar_lea.sflag [#allocation4], %s301
          %s303 = sand.u32 %s101, 1
          %s304 = smul.addr %s303, 2
          %s305 = scalar_lea.vmem [#allocation7], %s304
          %307 = dma.done %s302, 32
        $region48: #{tpu_custom_call.1} parent=43 // pred_fallthru
          _
      $region44: #{tpu_custom_call.1} parent=5 // pred_fallthru
        _
    $region6: #{tpu_custom_call.1} parent=1 // loop_footer
      %s21 = sadd.s32 1, %s17
    $region7: #{tpu_custom_call.1} parent=1 // loop_footer_branch
      %16 = sbr.rel target = $region3
    $region8: #{tpu_custom_call.1} parent=1 // loop_exit
      _
    %308 = vsyncpa [#allocation3], 1
    %s309 = scalar_lea.sflag [#allocation3], 1
    %310 = vsyncpa %s309, 1
    %311 = vsyncpa [#allocation6], 1
    %s312 = scalar_lea.sflag [#allocation6], 1
    %313 = vsyncpa %s312, 1
    %314 = vsyncpa [#allocation4], 1
    %s315 = scalar_lea.sflag [#allocation4], 1
    %316 = vsyncpa %s315, 1

</llo_original>
